<compile_context>
chip_gen: v7x
topology: tpu7x:2x2x1
jax: 0.10.0
libtpu: 0.0.40
codegen_flags: <defaults>
</compile_context>

<pallas_src>
import functools
import math

import jax
import jax.numpy as jnp
import numpy as np
from jax.experimental import pallas as pl
from jax.experimental.pallas import tpu as pltpu


def _round_up(x, m):
    return ((x + m - 1) // m) * m


def _vmem_capacity_bytes():
    try:
        return int(pltpu.get_tpu_info().vmem_capacity_bytes)
    except Exception:
        return 64 * 1024 * 1024  # conservative (v7x per-core VMEM)


def _choose_tiles(n_pad, c, budget_bytes, block_rows=None, block_cols=None):
    """Pick (tm, tn) row/column tiles. tn is lane-dense (multiple of 128) or full."""
    if block_cols is not None:
        if n_pad % block_cols != 0 or not (block_cols == n_pad or block_cols % 128 == 0):
            raise ValueError("block_cols must divide padded N and be a multiple of 128 "
                             "(or the full padded N)")
        tn = block_cols
    else:
        tn = n_pad
        for cand in (512, 256, 128):
            if n_pad % cand == 0:
                tn = cand
                break
    if block_rows is not None and n_pad % block_rows == 0:
        return block_rows, tn

    def usage(tm):
        temps = 6 * tm * tn * 4            # live (tm, tn) f32 temporaries (kernel 2)
        feats = 2 * (tm + tn) * c * 2      # double-buffered bf16 feature tiles
        small = 8 * tm * 4 + 4 * tn * 4    # row vectors / labels / scratch
        return temps + feats + small

    # TODO(synk): prefer 128-multiples on v5e (4x128 MXU); v5e/v6e not
    #             distinguishable cheaply here, so just go largest-first.
    tm = 8
    for cand in (512, 256, 128, 64, 32, 16, 8):
        if n_pad % cand == 0 and usage(cand) <= budget_bytes:
            tm = cand
            break
    return tm, tn


# ---------------------------------------------------------------------------
# kernel 0: row-wise L2 normalization (f32 math), bf16 output for the MXU
# ---------------------------------------------------------------------------
def _normalize_kernel(f1_ref, f2_ref, o1_ref, o2_ref):
    def norm(x):
        xf = x.astype(jnp.float32)
        # F.normalize(dim=1, eps=1e-12)  ==  x * rsqrt(max(sum(x^2), 1e-24))
        inv = jax.lax.rsqrt(jnp.maximum(jnp.sum(xf * xf, axis=1, keepdims=True), 1e-24))
        return xf * inv

    o1_ref[...] = norm(f1_ref[...]).astype(o1_ref.dtype)
    o2_ref[...] = norm(f2_ref[...]).astype(o2_ref.dtype)


def _curricular_ft(sim, cos_m, sin_m, threshold, mm):
    sin_theta = jnp.sqrt(jnp.maximum(1.0 - sim * sim, 0.0))
    return jnp.where(sim > threshold, sim * cos_m - sin_theta * sin_m, sim - mm)


# ---------------------------------------------------------------------------
# kernel 1: per-row positive statistics (row-parallel, column-accumulate)
# ---------------------------------------------------------------------------
def _row_stats_kernel(f1_ref, f2_ref, lc_ref, lr_ref,
                      sum_sim_ref, pos_cnt_ref, thr_num_ref,
                      *, cos_m, sin_m, threshold, mm, tn, n_valid, padded):
    j = pl.program_id(1)

    @pl.when(j == 0)
    def _():
        sum_sim_ref[...] = jnp.zeros_like(sum_sim_ref)
        pos_cnt_ref[...] = jnp.zeros_like(pos_cnt_ref)
        thr_num_ref[...] = jnp.zeros_like(thr_num_ref)

    # bf16 x bf16 -> f32 on the MXU (contract the channel axis of both).
    sim = jax.lax.dot_general(f1_ref[...], f2_ref[...],
                              (((1,), (1,)), ((), ())),
                              preferred_element_type=jnp.float32)
    sim = jnp.clip(sim, -1.0, 1.0)
    pos = lc_ref[...] == lr_ref[...]                       # (TM,1)==(1,TN) -> (TM,TN)
    if padded:
        col = j * tn + jax.lax.broadcasted_iota(jnp.int32, sim.shape, 1)
        pos = jnp.logical_and(pos, col < n_valid)

    ft = _curricular_ft(sim, cos_m, sin_m, threshold, mm)  # t-independent, precomputed
    sum_sim_ref[...] += jnp.sum(jnp.where(pos, sim, 0.0), axis=1, keepdims=True)
    pos_cnt_ref[...] += jnp.sum(pos.astype(jnp.float32), axis=1, keepdims=True)
    thr_num_ref[...] += jnp.sum(jnp.where(pos, ft, 0.0), axis=1, keepdims=True)


# ---------------------------------------------------------------------------
# kernel 2: per-row curricular NCE loss with online log-sum-exp over columns
# ---------------------------------------------------------------------------
def _loss_kernel(f1_ref, f2_ref, lc_ref, lr_ref, thr_ref, t_ref, out_ref,
                 m_sc, tot_sc, pos_sc,
                 *, cos_m, sin_m, threshold, mm, inv_T, tn, n_valid, padded):
    j = pl.program_id(1)

    @pl.when(j == 0)
    def _():
        m_sc[...] = jnp.full_like(m_sc, -jnp.inf)
        tot_sc[...] = jnp.zeros_like(tot_sc)
        pos_sc[...] = jnp.zeros_like(pos_sc)

    sim = jax.lax.dot_general(f1_ref[...], f2_ref[...],
                              (((1,), (1,)), ((), ())),
                              preferred_element_type=jnp.float32)
    sim = jnp.clip(sim, -1.0, 1.0)
    pos = lc_ref[...] == lr_ref[...]

    ft = _curricular_ft(sim, cos_m, sin_m, threshold, mm)
    t = t_ref[0]                                           # finalized scalar t (SMEM)
    # negatives: hard-example reweight sim*(t+sim) when raw sim > row_thr
    neg_scale = jnp.where(sim > thr_ref[...], t + sim, 1.0)
    z = jnp.where(pos, ft, sim * neg_scale) * inv_T
    if padded:
        col = j * tn + jax.lax.broadcasted_iota(jnp.int32, z.shape, 1)
        z = jnp.where(col < n_valid, z, -1e30)             # excluded from both masses

    # online log-sum-exp; the running-max shift cancels exactly in the ratio
    m_new = jnp.maximum(m_sc[...], jnp.max(z, axis=1, keepdims=True))
    scale = jnp.exp(m_sc[...] - m_new)
    p = jnp.exp(z - m_new)
    tot_sc[...] = scale * tot_sc[...] + jnp.sum(p, axis=1, keepdims=True)
    pos_sc[...] = scale * pos_sc[...] + jnp.sum(jnp.where(pos, p, 0.0), axis=1, keepdims=True)
    m_sc[...] = m_new

    @pl.when(j == pl.num_programs(1) - 1)
    def _():
        # -log(lp / (lp + ln)) == log(total) - log(lp)
        out_ref[...] = jnp.log(tot_sc[...]) - jnp.log(pos_sc[...])


# ---------------------------------------------------------------------------
# wrapper
# ---------------------------------------------------------------------------
def curricular_nce_loss(feature1, feature2, labels, t_prev=0.0, *,
                        gamma=2.0, keep_weight=1.0, T=0.07, m=0.5,
                        block_rows=None, block_cols=None):
    """Pallas implementation of CurricularNCE_loss.forward (weight_valid=False path)."""
    del gamma, keep_weight  # only used by the unreachable weight_valid branch
    N, C = feature1.shape
    alpha = 0.1
    cos_m, sin_m = math.cos(m), math.sin(m)
    threshold = math.cos(math.pi - m)
    mm = math.sin(math.pi - m) * m

    n_pad = _round_up(N, 8)
    padded = n_pad != N

    vmem_cap = _vmem_capacity_bytes()
    vmem_limit = max(32 * 1024 * 1024,
                     min(vmem_cap - 10 * 1024 * 1024, 100 * 1024 * 1024))
    tm, tn = _choose_tiles(n_pad, C, vmem_limit // 2, block_rows, block_cols)
    grid = (n_pad // tm, n_pad // tn)

    f1 = feature1.astype(jnp.float32)
    f2 = feature2.astype(jnp.float32)
    lab = labels.astype(jnp.int32)
    if padded:
        f1 = jnp.pad(f1, ((0, n_pad - N), (0, 0)))
        f2 = jnp.pad(f2, ((0, n_pad - N), (0, 0)))
        lab = jnp.pad(lab, (0, n_pad - N))
    lab_col = lab.reshape(n_pad, 1)
    lab_row = lab.reshape(1, n_pad)

    # ---- kernel 0: normalize rows once, emit bf16 MXU operands ----
    f1n, f2n = pl.pallas_call(
        _normalize_kernel,
        out_shape=(jax.ShapeDtypeStruct((n_pad, C), jnp.bfloat16),
                   jax.ShapeDtypeStruct((n_pad, C), jnp.bfloat16)),
        grid=(n_pad // tm,),
        in_specs=[pl.BlockSpec((tm, C), lambda i: (i, 0)),
                  pl.BlockSpec((tm, C), lambda i: (i, 0))],
        out_specs=(pl.BlockSpec((tm, C), lambda i: (i, 0)),
                   pl.BlockSpec((tm, C), lambda i: (i, 0))),
        compiler_params=pltpu.CompilerParams(
            dimension_semantics=("parallel",),
            vmem_limit_bytes=vmem_limit),
    )(f1, f2)

    matmul_flops = 2 * n_pad * n_pad * C
    feat_bytes = 2 * n_pad * C * 2 * max(1, grid[0])  # feature2 re-streamed per row tile

    # ---- kernel 1: per-row positive-similarity statistics (megacore-parallel rows) ----
    kernel1 = functools.partial(_row_stats_kernel, cos_m=cos_m, sin_m=sin_m,
                                threshold=threshold, mm=mm, tn=tn,
                                n_valid=N, padded=padded)
    sum_sim, pos_cnt, thr_num = pl.pallas_call(
        kernel1,
        out_shape=(jax.ShapeDtypeStruct((n_pad, 1), jnp.float32),) * 3,
        grid=grid,
        in_specs=[pl.BlockSpec((tm, C), lambda i, j: (i, 0)),
                  pl.BlockSpec((tn, C), lambda i, j: (j, 0)),
                  pl.BlockSpec((tm, 1), lambda i, j: (i, 0)),
                  pl.BlockSpec((1, tn), lambda i, j: (0, j))],
        out_specs=(pl.BlockSpec((tm, 1), lambda i, j: (i, 0)),) * 3,
        compiler_params=pltpu.CompilerParams(
            dimension_semantics=("parallel", "arbitrary"),
            vmem_limit_bytes=vmem_limit),
        cost_estimate=pl.CostEstimate(
            flops=matmul_flops + 12 * n_pad * n_pad,
            transcendentals=n_pad * n_pad,
            bytes_accessed=feat_bytes + 3 * n_pad * 4),
    )(f1n, f2n, lab_col, lab_row)

    # global curricular scalar t (padded rows excluded by slicing)
    sum_sim_tot = jnp.sum(sum_sim[:N, 0])
    pos_cnt_tot = jnp.sum(pos_cnt[:N, 0])
    t_prev = jnp.asarray(t_prev, jnp.float32)
    t_new = alpha * (sum_sim_tot / pos_cnt_tot) + (1.0 - alpha) * t_prev
    t_arr = jnp.reshape(t_new, (1,)).astype(jnp.float32)

    # exact per-row threshold = mean of margin-adjusted positive sims
    row_thr = jnp.where(pos_cnt > 0.0, thr_num / jnp.maximum(pos_cnt, 1.0), 0.0)

    # ---- kernel 2: per-row loss, row-parallel, online column accumulation ----
    kernel2 = functools.partial(_loss_kernel, cos_m=cos_m, sin_m=sin_m,
                                threshold=threshold, mm=mm, inv_T=1.0 / T,
                                tn=tn, n_valid=N, padded=padded)
    per_row = pl.pallas_call(
        kernel2,
        out_shape=jax.ShapeDtypeStruct((n_pad, 1), jnp.float32),
        grid=grid,
        in_specs=[pl.BlockSpec((tm, C), lambda i, j: (i, 0)),
                  pl.BlockSpec((tn, C), lambda i, j: (j, 0)),
                  pl.BlockSpec((tm, 1), lambda i, j: (i, 0)),
                  pl.BlockSpec((1, tn), lambda i, j: (0, j)),
                  pl.BlockSpec((tm, 1), lambda i, j: (i, 0)),
                  pl.BlockSpec(memory_space=pltpu.MemorySpace.SMEM)],   # scalar t
        out_specs=pl.BlockSpec((tm, 1), lambda i, j: (i, 0)),
        scratch_shapes=[pltpu.VMEM((tm, 1), jnp.float32)] * 3,          # m, total, pos
        compiler_params=pltpu.CompilerParams(
            dimension_semantics=("parallel", "arbitrary"),
            vmem_limit_bytes=vmem_limit),
        cost_estimate=pl.CostEstimate(
            flops=matmul_flops + 20 * n_pad * n_pad,
            transcendentals=2 * n_pad * n_pad,
            bytes_accessed=feat_bytes + 2 * n_pad * 4),
    )(f1n, f2n, lab_col, lab_row, row_thr, t_arr)

    return jnp.sum(per_row[:N, 0]) / N


# ---------------------------------------------------------------------------
# pure-JAX f32 reference mirroring the PyTorch forward (weight_valid=False)
# ---------------------------------------------------------------------------
def _reference(f1, f2, labels, t_prev=0.0, T=0.07, m=0.5, alpha=0.1):
    cos_m, sin_m = math.cos(m), math.sin(m)
    threshold = math.cos(math.pi - m)
    mm = math.sin(math.pi - m) * m
    f1n = f1 / jnp.maximum(jnp.linalg.norm(f1, axis=1, keepdims=True), 1e-12)
    f2n = f2 / jnp.maximum(jnp.linalg.norm(f2, axis=1, keepdims=True), 1e-12)
    sim = jnp.clip(jnp.einsum('nc,kc->nk', f1n, f2n,
                              precision=jax.lax.Precision.HIGHEST), -1.0, 1.0)
    pos = (labels[:, None] == labels[None, :]).astype(jnp.float32)
    neg = 1.0 - pos
    t = alpha * (jnp.sum(sim * pos) / jnp.sum(pos)) + (1.0 - alpha) * t_prev
    ft = jnp.where(sim > threshold,
                   sim * cos_m - jnp.sqrt(1.0 - sim * sim) * sin_m,
                   sim - mm)
    sim_p = jnp.where(pos > 0, ft, sim)
    row_thr = jnp.sum(sim_p * pos, axis=1, keepdims=True) / jnp.sum(pos, axis=1, keepdims=True)
    sim_h = jnp.where(sim_p > row_thr, sim_p * (t + sim_p), sim_p)
    sim_f = jnp.where(pos > 0, ft, sim_h)
    logits = jnp.exp(sim_f / T)
    lp = jnp.sum(logits * pos, axis=1)
    ln = jnp.sum(logits * neg, axis=1)
    return -jnp.sum(jnp.log(lp / (lp + ln))) / f1.shape[0]


if __name__ == "__main__":
    key = jax.random.PRNGKey(0)
    k1, k2, k3, k4, k5, k6 = jax.random.split(key, 6)

    # case 1: small shape, two row tiles (parallel axis), single column tile
    N, C = 32, 64
    feature1 = jax.random.normal(k1, (N, C), dtype=jnp.float32)
    feature2 = jax.random.normal(k2, (N, C), dtype=jnp.float32)
    labels = jnp.arange(N, dtype=jnp.int32) // 4            # 8 classes x 4
    loss = curricular_nce_loss(feature1, feature2, labels, 0.0, block_rows=16)
    jax.block_until_ready(loss)
    ref = _reference(feature1, feature2, labels, 0.0)
    np.testing.assert_allclose(np.asarray(loss), np.asarray(ref), rtol=1e-2, atol=1e-2)

    # case 2: multi row-tile x multi column-tile (exercises online accumulation)
    N2, C2 = 256, 64
    f1b = jax.random.normal(k3, (N2, C2), dtype=jnp.float32)
    f2b = jax.random.normal(k4, (N2, C2), dtype=jnp.float32)
    lab_b = jnp.arange(N2, dtype=jnp.int32) // 8             # 32 classes x 8
    loss_b = curricular_nce_loss(f1b, f2b, lab_b, 0.0, block_rows=128, block_cols=128)
    jax.block_until_ready(loss_b)
    ref_b = _reference(f1b, f2b, lab_b, 0.0)
    np.testing.assert_allclose(np.asarray(loss_b), np.asarray(ref_b), rtol=3e-2, atol=3e-2)

    # case 3: ragged N (not a multiple of 8) -> zero-padded + masked path
    N3, C3 = 52, 64
    f1c = jax.random.normal(k5, (N3, C3), dtype=jnp.float32)
    f2c = jax.random.normal(k6, (N3, C3), dtype=jnp.float32)
    lab_c = jnp.arange(N3, dtype=jnp.int32) // 4             # 13 classes x 4
    loss_c = curricular_nce_loss(f1c, f2c, lab_c, 0.0)
    jax.block_until_ready(loss_c)
    ref_c = _reference(f1c, f2c, lab_c, 0.0)
    np.testing.assert_allclose(np.asarray(loss_c), np.asarray(ref_c), rtol=3e-2, atol=3e-2)

    print("KERNEL_OK")
</pallas_src>

<mosaic_0001>
module attributes {stable_mosaic.version = 11 : i64} {
  func.func @_normalize_kernel(%arg0: i32, %arg1: memref<16x64xf32, #tpu.memory_space<vmem>>, %arg2: memref<16x64xf32, #tpu.memory_space<vmem>>, %arg3: memref<16x64xbf16, #tpu.memory_space<vmem>>, %arg4: memref<16x64xbf16, #tpu.memory_space<vmem>>) attributes {dimension_semantics = [#tpu.dimension_semantics<parallel>], iteration_bounds = array<i64: 2>, scalar_prefetch = 0 : i64, scratch_operands = 0 : i64, tpu.core_type = #tpu.core_type<tc>, window_params = [{transform_indices = @transform_0, window_bounds = array<i64: 16, 64>}, {transform_indices = @transform_1, window_bounds = array<i64: 16, 64>}, {transform_indices = @transform_2, window_bounds = array<i64: 16, 64>}, {transform_indices = @transform_3, window_bounds = array<i64: 16, 64>}]} {
    %c0 = arith.constant 0 : index
    %c0_0 = arith.constant 0 : index
    %0 = vector.load %arg1[%c0, %c0_0] : memref<16x64xf32, #tpu.memory_space<vmem>>, vector<16x64xf32>
    %1 = arith.mulf %0, %0 : vector<16x64xf32>
    %cst = arith.constant dense<0.000000e+00> : vector<16xf32>
    %2 = vector.multi_reduction <add>, %1, %cst [1] : vector<16x64xf32> to vector<16xf32>
    %3 = vector.shape_cast %2 : vector<16xf32> to vector<16x1xf32>
    %cst_1 = arith.constant 1.000000e-24 : f32
    %4 = vector.broadcast %cst_1 : f32 to vector<16x1xf32>
    %5 = arith.maximumf %3, %4 : vector<16x1xf32>
    %6 = math.rsqrt %5 : vector<16x1xf32>
    %7 = vector.broadcast %6 : vector<16x1xf32> to vector<16x64xf32>
    %8 = arith.mulf %0, %7 : vector<16x64xf32>
    %9 = arith.truncf %8 : vector<16x64xf32> to vector<16x64xbf16>
    %c0_2 = arith.constant 0 : index
    %c0_3 = arith.constant 0 : index
    %10 = vector.load %arg3[%c0_2, %c0_3] : memref<16x64xbf16, #tpu.memory_space<vmem>>, vector<16x64xbf16>
    tpu.vector_store %arg3[%c0_2, %c0_3], %9 {strides = array<i32>} : memref<16x64xbf16, #tpu.memory_space<vmem>>, vector<16x64xbf16>,
    %c0_4 = arith.constant 0 : index
    %c0_5 = arith.constant 0 : index
    %11 = vector.load %arg2[%c0_4, %c0_5] : memref<16x64xf32, #tpu.memory_space<vmem>>, vector<16x64xf32>
    %12 = arith.mulf %11, %11 : vector<16x64xf32>
    %cst_6 = arith.constant dense<0.000000e+00> : vector<16xf32>
    %13 = vector.multi_reduction <add>, %12, %cst_6 [1] : vector<16x64xf32> to vector<16xf32>
    %14 = vector.shape_cast %13 : vector<16xf32> to vector<16x1xf32>
    %cst_7 = arith.constant 1.000000e-24 : f32
    %15 = vector.broadcast %cst_7 : f32 to vector<16x1xf32>
    %16 = arith.maximumf %14, %15 : vector<16x1xf32>
    %17 = math.rsqrt %16 : vector<16x1xf32>
    %18 = vector.broadcast %17 : vector<16x1xf32> to vector<16x64xf32>
    %19 = arith.mulf %11, %18 : vector<16x64xf32>
    %20 = arith.truncf %19 : vector<16x64xf32> to vector<16x64xbf16>
    %c0_8 = arith.constant 0 : index
    %c0_9 = arith.constant 0 : index
    %21 = vector.load %arg4[%c0_8, %c0_9] : memref<16x64xbf16, #tpu.memory_space<vmem>>, vector<16x64xbf16>
    tpu.vector_store %arg4[%c0_8, %c0_9], %20 {strides = array<i32>} : memref<16x64xbf16, #tpu.memory_space<vmem>>, vector<16x64xbf16>,
    return
  }
  func.func @transform_0(%arg0: i32) -> (i32, i32) {
    %c0_i32 = arith.constant 0 : i32
    %c0_i32_0 = arith.constant 0 : i32
    return %arg0, %c0_i32 : i32, i32
  }
  func.func @transform_1(%arg0: i32) -> (i32, i32) {
    %c0_i32 = arith.constant 0 : i32
    %c0_i32_0 = arith.constant 0 : i32
    return %arg0, %c0_i32 : i32, i32
  }
  func.func @transform_2(%arg0: i32) -> (i32, i32) {
    %c0_i32 = arith.constant 0 : i32
    %c0_i32_0 = arith.constant 0 : i32
    return %arg0, %c0_i32 : i32, i32
  }
  func.func @transform_3(%arg0: i32) -> (i32, i32) {
    %c0_i32 = arith.constant 0 : i32
    %c0_i32_0 = arith.constant 0 : i32
    return %arg0, %c0_i32 : i32, i32
  }
}

</mosaic_0001>

<llo_original>
// kernel: tpu_custom_call.1
$region0: #{tpu_custom_call.1}
  #allocation0 [shape = 'u32[]', space=smem, size = 0x4, offset = 0x4, fixed_abs, tag = 'smem constant byte address 0x4 - core index']
  #allocation1 [shape = 'u32[144,128]{1,0:T(1,128)}', space=vmem, size = 0x12000, scoped, tag = 'internal scratch']
  %s0 = inlined_call_operand.hbm [shape: f32[32,64], index: 0, kind: input, shape index: {}]
  %s1 = inlined_call_operand.hbm [shape: f32[32,64], index: 1, kind: input, shape index: {}]
  %s2 = inlined_call_operand.hbm [shape: bf16[32,64], index: 2, kind: output, shape index: {0}]
  %s3 = inlined_call_operand.hbm [shape: bf16[32,64], index: 3, kind: output, shape index: {1}]
  %4 = xla_tuple %s2, %s3
  %s5 = sld [smem:[#allocation0]]
  $region57: #{tpu_custom_call.1} parent=0
    _
  %s7 = ssub.s32 1, %s5
  %s8 = scalar_select 0, %s7, %s5
  $region1: #{tpu_custom_call.1} parent=0
    #allocation2 [shape = 'u8[16384]{0}', space=vmem, size = 0x4000, scoped, tag = 'input window, operand 0']
    #allocation3 [shape = 's32[2]{0}', space=sflag, size = 0x8, scoped, tag = 'scoped memory for tpu_custom_call.1']
    #allocation4 [shape = 's32[2]{0}', space=sflag, size = 0x8, scoped, tag = 'scoped memory for tpu_custom_call.1']
    #allocation5 [shape = 'u8[16384]{0}', space=vmem, size = 0x4000, scoped, tag = 'input window, operand 1']
    #allocation6 [shape = 's32[2]{0}', space=sflag, size = 0x8, scoped, tag = 'scoped memory for tpu_custom_call.1']
    #allocation7 [shape = 'u8[8192]{0}', space=vmem, size = 0x2000, scoped, tag = 'output window, operand 0']
    #allocation8 [shape = 'u8[8192]{0}', space=vmem, size = 0x2000, scoped, tag = 'output window, operand 1']
    #allocation9 [shape = 's32[2]{0}', space=sflag, size = 0x8, scoped, tag = 'scoped memory for tpu_custom_call.1']
    %9 = vsyncpa [#allocation3], 0
    %s10 = scalar_lea.sflag [#allocation3], 1
    %11 = vsyncpa %s10, 0
    %12 = vsyncpa [#allocation6], 0
    %s13 = scalar_lea.sflag [#allocation6], 1
    %14 = vsyncpa %s13, 0
    %15 = vsyncpa [#allocation4], 0
    %s16 = scalar_lea.sflag [#allocation4], 1
    %17 = vsyncpa %s16, 0
    %18 = vsyncpa [#allocation9], 0
    %s19 = scalar_lea.sflag [#allocation9], 1
    %20 = vsyncpa %s19, 0
    loop: start=0, step=1, limit=4
    $region2: #{tpu_custom_call.1} parent=1 // loop_pre_header
      _
    $region3: #{tpu_custom_call.1} parent=1 // loop_header
      %s22 = sphi 0, %s26
      %p23 = scmp.ge.s32.totalorder %s22, 4
      %s32 = sphi 0, %s34
      %s35 = sphi 0, %s32
      %s36 = sphi 0, %s35
      %s52 = sphi 0, %s36
      %s58 = sphi 0, %s60
      %s61 = sphi 0, %s58
      %s62 = sphi 0, %s61
      %s78 = sphi 0, %s62
      %s84 = sphi 0, %s86
      %s87 = sphi 0, %s84
      %s88 = sphi 0, %s87
      %s104 = sphi 0, %s88
      %s110 = sphi 0, %s112
      %s113 = sphi 0, %s110
      %s114 = sphi 0, %s113
      %s130 = sphi 0, %s114
    $region4: #{tpu_custom_call.1} parent=1 // loop_header_branch
      %25 = sbr.rel (%p23) target = $region8
    $region5: #{tpu_custom_call.1} parent=1 // loop_body
      %s27 = ssub.s32 %s22, 1
      %s28 = ssub.s32 %s22, 2
      %s29 = sadd.s32 %s22, 1
      %s30 = ssub.s32 %s22, %s29
      %p31 = scmp.eq.s32.totalorder %s30, 0
      %s33 = sadd.s32 %s32, 1
      %s34 = scalar_select %p31, %s32, %s33
      %p37 = pneg %p31
      %p38 = scmp.eq.s32.totalorder %s22, 1
      %p39 = por %p37, %p38
      %p40 = scmp.ne.s32.totalorder %s32, %s35
      %p41 = scmp.eq.s32.totalorder %s22, 0
      %p42 = por %p40, %p41
      %p43 = scmp.ne.s32.totalorder %s32, %s35
      %p44 = scmp.eq.s32.totalorder %s27, 1
      %p45 = por %p43, %p44
      %p46 = scmp.ne.s32.totalorder %s35, %s36
      %p47 = scmp.eq.s32.totalorder %s27, 0
      %p48 = por %p46, %p47
      %p49 = scmp.ne.s32.totalorder %s35, %s36
      %p50 = scmp.eq.s32.totalorder %s28, 1
      %p51 = por %p49, %p50
      %p53 = scmp.ne.s32.totalorder %s36, %s52
      %p54 = scmp.eq.s32.totalorder %s28, 0
      %p55 = por %p53, %p54
      %s56 = ssub.s32 %s22, %s29
      %p57 = scmp.eq.s32.totalorder %s56, 0
      %s59 = sadd.s32 %s58, 1
      %s60 = scalar_select %p57, %s58, %s59
      %p63 = pneg %p57
      %p64 = scmp.eq.s32.totalorder %s22, 1
      %p65 = por %p63, %p64
      %p66 = scmp.ne.s32.totalorder %s58, %s61
      %p67 = scmp.eq.s32.totalorder %s22, 0
      %p68 = por %p66, %p67
      %p69 = scmp.ne.s32.totalorder %s58, %s61
      %p70 = scmp.eq.s32.totalorder %s27, 1
      %p71 = por %p69, %p70
      %p72 = scmp.ne.s32.totalorder %s61, %s62
      %p73 = scmp.eq.s32.totalorder %s27, 0
      %p74 = por %p72, %p73
      %p75 = scmp.ne.s32.totalorder %s61, %s62
      %p76 = scmp.eq.s32.totalorder %s28, 1
      %p77 = por %p75, %p76
      %p79 = scmp.ne.s32.totalorder %s62, %s78
      %p80 = scmp.eq.s32.totalorder %s28, 0
      %p81 = por %p79, %p80
      %s82 = ssub.s32 %s22, %s29
      %p83 = scmp.eq.s32.totalorder %s82, 0
      %s85 = sadd.s32 %s84, 1
      %s86 = scalar_select %p83, %s84, %s85
      %p89 = pneg %p83
      %p90 = scmp.eq.s32.totalorder %s22, 1
      %p91 = por %p89, %p90
      %p92 = scmp.ne.s32.totalorder %s84, %s87
      %p93 = scmp.eq.s32.totalorder %s22, 0
      %p94 = por %p92, %p93
      %p95 = scmp.ne.s32.totalorder %s84, %s87
      %p96 = scmp.eq.s32.totalorder %s27, 1
      %p97 = por %p95, %p96
      %p98 = scmp.ne.s32.totalorder %s87, %s88
      %p99 = scmp.eq.s32.totalorder %s27, 0
      %p100 = por %p98, %p99
      %p101 = scmp.ne.s32.totalorder %s87, %s88
      %p102 = scmp.eq.s32.totalorder %s28, 1
      %p103 = por %p101, %p102
      %p105 = scmp.ne.s32.totalorder %s88, %s104
      %p106 = scmp.eq.s32.totalorder %s28, 0
      %p107 = por %p105, %p106
      %s108 = ssub.s32 %s22, %s29
      %p109 = scmp.eq.s32.totalorder %s108, 0
      %s111 = sadd.s32 %s110, 1
      %s112 = scalar_select %p109, %s110, %s111
      %p115 = pneg %p109
      %p116 = scmp.eq.s32.totalorder %s22, 1
      %p117 = por %p115, %p116
      %p118 = scmp.ne.s32.totalorder %s110, %s113
      %p119 = scmp.eq.s32.totalorder %s22, 0
      %p120 = por %p118, %p119
      %p121 = scmp.ne.s32.totalorder %s110, %s113
      %p122 = scmp.eq.s32.totalorder %s27, 1
      %p123 = por %p121, %p122
      %p124 = scmp.ne.s32.totalorder %s113, %s114
      %p125 = scmp.eq.s32.totalorder %s27, 0
      %p126 = por %p124, %p125
      %p127 = scmp.ne.s32.totalorder %s113, %s114
      %p128 = scmp.eq.s32.totalorder %s28, 1
      %p129 = por %p127, %p128
      %p131 = scmp.ne.s32.totalorder %s114, %s130
      %p132 = scmp.eq.s32.totalorder %s28, 0
      %p133 = por %p131, %p132
      %p134 = scmp.le.s32.totalorder 1, %s22
      %p135 = scmp.lt.s32.totalorder %s22, 3
      %p136 = pnand %p134, %p135
      %p137 = pneg %p136
      // Predicated region
      $region9: #{tpu_custom_call.1} parent=5 // pred_check
        _
      $region10: #{tpu_custom_call.1} parent=5 // pred_check_branch
        %139 = sbr.rel (%p136) target = $region12
      $region11: #{tpu_custom_call.1} parent=5 // pred_region
        %s140 = ssub.s32 %s22, 1
      $region12: #{tpu_custom_call.1} parent=5 // pred_fallthru
        _
      %p141 = scmp.lt.s32.totalorder %s22, 2
      // Predicated region
      $region13: #{tpu_custom_call.1} parent=5 // pred_check
        %p142 = pneg %p141
      $region14: #{tpu_custom_call.1} parent=5 // pred_check_branch
        %144 = sbr.rel (%p142) target = $region16
      $region15: #{tpu_custom_call.1} parent=5 // pred_region
        // Predicated region
        $region17: #{tpu_custom_call.1} parent=15 // pred_check
          %p145 = pneg %p42
        $region18: #{tpu_custom_call.1} parent=15 // pred_check_branch
          %147 = sbr.rel (%p145) target = $region20
        $region19: #{tpu_custom_call.1} parent=15 // pred_region
          %s148 = sand.u32 %s32, 1
          %s149 = scalar_lea.sflag [#allocation3], %s148
          %s150 = sand.u32 %s32, 1
          %s151 = smul.addr %s150, 16
          %s152 = scalar_lea.vmem [#allocation2], %s151
          %s153 = smul.u32 2, %s22
          %s155 = ssub.s32 256, 256
          %156 = vsyncadd %s149, %s155
          %s157 = smul.addr %s153, 128
          %s158 = scalar_lea.hbm %s0, %s157
          %s159 = sshll.u32 %s152, 4
          %s160 = int_to_ptr.vmem [resolvable:$true] %s159
          %165 = dma.hbm_to_vmem [thread:$0]  %s158, 256, %s160, %s149, 128, 128, 8
        $region20: #{tpu_custom_call.1} parent=15 // pred_fallthru
          _
        // Predicated region
        $region21: #{tpu_custom_call.1} parent=15 // pred_check
          %p166 = pneg %p68
        $region22: #{tpu_custom_call.1} parent=15 // pred_check_branch
          %168 = sbr.rel (%p166) target = $region24
        $region23: #{tpu_custom_call.1} parent=15 // pred_region
          %s169 = sand.u32 %s58, 1
          %s170 = scalar_lea.sflag [#allocation6], %s169
          %s171 = sand.u32 %s58, 1
          %s172 = smul.addr %s171, 16
          %s173 = scalar_lea.vmem [#allocation5], %s172
          %s174 = smul.u32 2, %s22
          %s176 = ssub.s32 256, 256
          %177 = vsyncadd %s170, %s176
          %s178 = smul.addr %s174, 128
          %s179 = scalar_lea.hbm %s1, %s178
          %s180 = sshll.u32 %s173, 4
          %s181 = int_to_ptr.vmem [resolvable:$true] %s180
          %186 = dma.hbm_to_vmem [thread:$0]  %s179, 256, %s181, %s170, 128, 128, 8
        $region24: #{tpu_custom_call.1} parent=15 // pred_fallthru
          _
      $region16: #{tpu_custom_call.1} parent=5 // pred_fallthru
        _
      %p187 = scmp.le.s32.totalorder 1, %s22
      %p188 = scmp.lt.s32.totalorder %s22, 3
      %p189 = pnand %p187, %p188
      %p190 = pneg %p189
      // Predicated region
      $region25: #{tpu_custom_call.1} parent=5 // pred_check
        _
      $region26: #{tpu_custom_call.1} parent=5 // pred_check_branch
        %192 = sbr.rel (%p189) target = $region28
      $region27: #{tpu_custom_call.1} parent=5 // pred_region
        %s193 = ssub.s32 %s22, 1
        %s194 = sand.u32 %s35, 1
        %s195 = scalar_lea.sflag [#allocation3], %s194
        %s196 = sand.u32 %s35, 1
        %s197 = smul.addr %s196, 16
        %s198 = scalar_lea.vmem [#allocation2], %s197
        // Predicated region
        $region29: #{tpu_custom_call.1} parent=27 // pred_check
          %p199 = pneg %p48
        $region30: #{tpu_custom_call.1} parent=27 // pred_check_branch
          %201 = sbr.rel (%p199) target = $region32
        $region31: #{tpu_custom_call.1} parent=27 // pred_region
          %202 = dma.done %s195, 256
        $region32: #{tpu_custom_call.1} parent=27 // pred_fallthru
          _
        %s203 = sand.u32 %s61, 1
        %s204 = scalar_lea.sflag [#allocation6], %s203
        %s205 = sand.u32 %s61, 1
        %s206 = smul.addr %s205, 16
        %s207 = scalar_lea.vmem [#allocation5], %s206
        // Predicated region
        $region33: #{tpu_custom_call.1} parent=27 // pred_check
          %p208 = pneg %p74
        $region34: #{tpu_custom_call.1} parent=27 // pred_check_branch
          %210 = sbr.rel (%p208) target = $region36
        $region35: #{tpu_custom_call.1} parent=27 // pred_region
          %211 = dma.done %s204, 256
        $region36: #{tpu_custom_call.1} parent=27 // pred_fallthru
          _
        %s212 = sand.u32 %s35, 1
        %s213 = scalar_lea.sflag [#allocation3], %s212
        %s214 = sand.u32 %s35, 1
        %s215 = smul.addr %s214, 16
        %s216 = scalar_lea.vmem [#allocation2], %s215
        %p217 = pneg %p48
        %p218 = pneg %p45
        %s219 = sand.u32 %s61, 1
        %s220 = scalar_lea.sflag [#allocation6], %s219
        %s221 = sand.u32 %s61, 1
        %s222 = smul.addr %s221, 16
        %s223 = scalar_lea.vmem [#allocation5], %s222
        %p224 = pneg %p74
        %p225 = pneg %p71
        %p226 = pneg %p100
        %p227 = pneg %p97
        %s228 = sand.u32 %s87, 1
        %s229 = scalar_lea.sflag [#allocation4], %s228
        %s230 = sand.u32 %s87, 1
        %s231 = smul.addr %s230, 8
        %s232 = scalar_lea.vmem [#allocation7], %s231
        %p233 = pneg %p126
        %p234 = pneg %p123
        %s235 = sand.u32 %s113, 1
        %s236 = scalar_lea.sflag [#allocation9], %s235
        %s237 = sand.u32 %s113, 1
        %s238 = smul.addr %s237, 8
        %s239 = scalar_lea.vmem [#allocation8], %s238
        %s240 = smul.u32 2, %s27
        %s241 = smul.u32 2, %s27
        %s242 = smul.u32 2, %s27
        %s243 = smul.u32 2, %s27
        %v244 = vld [vmem:[%s198] sm:$0xff]
        %v245 = vld [vmem:[%s198 + $0x8] sm:$0xff]
        %v246 = vmul.f32 %v244, %v244
        %v247 = vmul.f32 %v245, %v245
        %vm248 = vcmask 523264
        %v249 = vsel %vm248, %v246, 0.0
        %250 = vadd.xlane.f32.xlu0 %v249
        %v251 = vpop.xlane.xlu0 %250
        %v252 = vsel %vm248, %v247, 0.0
        %253 = vadd.xlane.f32.xlu0 %v252
        %v254 = vpop.xlane.xlu0 %253
        %v255 = vmax.f32 %v251, 1e-24
        %v256 = vmax.f32 %v254, 1e-24
        %v257 = vrsqrt.pop %v255
        %v258 = vrsqrt.pop %v256
        %v259 = vmul.f32 %v244, %v257
        %v260 = vmul.f32 %v245, %v258
        %v261 = vpack.c.bf16 %v260, %v259
        %v263 = vunpack.c.l.b16 %v261
        %v264 = vunpack.c.h.b16 %v261
        %v265 = vpack.c.b16 %v263, %v263
        %v266 = vpack.c.b16 %v264, %v264
        %vm269 = vcmask 519168
        %270 = vst.msk [vmem:[%s232] sm:$0xf] %vm269, %v265
        %271 = vst.msk [vmem:[%s232 + $0x4] sm:$0xf] %vm269, %v266
        %v272 = vld [vmem:[%s207] sm:$0xff]
        %v273 = vld [vmem:[%s207 + $0x8] sm:$0xff]
        %v274 = vmul.f32 %v272, %v272
        %v275 = vmul.f32 %v273, %v273
        %v276 = vsel %vm248, %v274, 0.0
        %277 = vadd.xlane.f32.xlu0 %v276
        %v278 = vpop.xlane.xlu0 %277
        %v279 = vsel %vm248, %v275, 0.0
        %280 = vadd.xlane.f32.xlu0 %v279
        %v281 = vpop.xlane.xlu0 %280
        %v282 = vmax.f32 %v278, 1e-24
        %v283 = vmax.f32 %v281, 1e-24
        %v284 = vrsqrt.pop %v282
        %v285 = vrsqrt.pop %v283
        %v286 = vmul.f32 %v272, %v284
        %v287 = vmul.f32 %v273, %v285
        %v288 = vpack.c.bf16 %v287, %v286
        %v290 = vunpack.c.l.b16 %v288
        %v291 = vunpack.c.h.b16 %v288
        %v292 = vpack.c.b16 %v290, %v290
        %v293 = vpack.c.b16 %v291, %v291
        %296 = vst.msk [vmem:[%s239] sm:$0xf] %vm269, %v292
        %297 = vst.msk [vmem:[%s239 + $0x4] sm:$0xf] %vm269, %v293
        %s298 = sand.u32 %s87, 1
        %s299 = scalar_lea.sflag [#allocation4], %s298
        %s300 = sand.u32 %s87, 1
        %s301 = smul.addr %s300, 8
        %s302 = scalar_lea.vmem [#allocation7], %s301
        %s303 = sand.u32 %s113, 1
        %s304 = scalar_lea.sflag [#allocation9], %s303
        %s305 = sand.u32 %s113, 1
        %s306 = smul.addr %s305, 8
        %s307 = scalar_lea.vmem [#allocation8], %s306
        // Predicated region
        $region37: #{tpu_custom_call.1} parent=27 // pred_check
          %p308 = pneg %p97
        $region38: #{tpu_custom_call.1} parent=27 // pred_check_branch
          %310 = sbr.rel (%p308) target = $region40
        $region39: #{tpu_custom_call.1} parent=27 // pred_region
          %s311 = smul.u32 2, %s27
          %s313 = ssub.s32 128, 128
          %314 = vsyncadd %s299, %s313
          %s315 = smul.addr %s311, 64
          %s316 = scalar_lea.hbm %s2, %s315
          %s317 = sshll.u32 %s302, 4
          %s318 = int_to_ptr.vmem [resolvable:$true] %s317
          %323 = dma.vmem_to_hbm [thread:$0]  %s318, 128, %s316, %s299, 64, 64, 4
        $region40: #{tpu_custom_call.1} parent=27 // pred_fallthru
          _
        // Predicated region
        $region41: #{tpu_custom_call.1} parent=27 // pred_check
          %p324 = pneg %p123
        $region42: #{tpu_custom_call.1} parent=27 // pred_check_branch
          %326 = sbr.rel (%p324) target = $region44
        $region43: #{tpu_custom_call.1} parent=27 // pred_region
          %s327 = smul.u32 2, %s27
          %s329 = ssub.s32 128, 128
          %330 = vsyncadd %s304, %s329
          %s331 = smul.addr %s327, 64
          %s332 = scalar_lea.hbm %s3, %s331
          %s333 = sshll.u32 %s307, 4
          %s334 = int_to_ptr.vmem [resolvable:$true] %s333
          %339 = dma.vmem_to_hbm [thread:$0]  %s334, 128, %s332, %s304, 64, 64, 4
        $region44: #{tpu_custom_call.1} parent=27 // pred_fallthru
          _
      $region28: #{tpu_custom_call.1} parent=5 // pred_fallthru
        _
      %p340 = scmp.le.s32.totalorder 2, %s22
      // Predicated region
      $region45: #{tpu_custom_call.1} parent=5 // pred_check
        %p341 = pneg %p340
      $region46: #{tpu_custom_call.1} parent=5 // pred_check_branch
        %343 = sbr.rel (%p341) target = $region48
      $region47: #{tpu_custom_call.1} parent=5 // pred_region
        %s344 = ssub.s32 %s22, 2
        // Predicated region
        $region49: #{tpu_custom_call.1} parent=47 // pred_check
          %p345 = pneg %p103
        $region50: #{tpu_custom_call.1} parent=47 // pred_check_branch
          %347 = sbr.rel (%p345) target = $region52
        $region51: #{tpu_custom_call.1} parent=47 // pred_region
          %s348 = sand.u32 %s88, 1
          %s349 = scalar_lea.sflag [#allocation4], %s348
          %s350 = sand.u32 %s88, 1
          %s351 = smul.addr %s350, 8
          %s352 = scalar_lea.vmem [#allocation7], %s351
          %353 = dma.done %s349, 128
        $region52: #{tpu_custom_call.1} parent=47 // pred_fallthru
          _
        // Predicated region
        $region53: #{tpu_custom_call.1} parent=47 // pred_check
          %p354 = pneg %p129
        $region54: #{tpu_custom_call.1} parent=47 // pred_check_branch
          %356 = sbr.rel (%p354) target = $region56
        $region55: #{tpu_custom_call.1} parent=47 // pred_region
          %s357 = sand.u32 %s114, 1
          %s358 = scalar_lea.sflag [#allocation9], %s357
          %s359 = sand.u32 %s114, 1
          %s360 = smul.addr %s359, 8
          %s361 = scalar_lea.vmem [#allocation8], %s360
          %362 = dma.done %s358, 128
        $region56: #{tpu_custom_call.1} parent=47 // pred_fallthru
          _
      $region48: #{tpu_custom_call.1} parent=5 // pred_fallthru
        _
    $region6: #{tpu_custom_call.1} parent=1 // loop_footer
      %s26 = sadd.s32 1, %s22
    $region7: #{tpu_custom_call.1} parent=1 // loop_footer_branch
      %21 = sbr.rel target = $region3
    $region8: #{tpu_custom_call.1} parent=1 // loop_exit
      _
    %363 = vsyncpa [#allocation3], 1
    %s364 = scalar_lea.sflag [#allocation3], 1
    %365 = vsyncpa %s364, 1
    %366 = vsyncpa [#allocation6], 1
    %s367 = scalar_lea.sflag [#allocation6], 1
    %368 = vsyncpa %s367, 1
    %369 = vsyncpa [#allocation4], 1
    %s370 = scalar_lea.sflag [#allocation4], 1
    %371 = vsyncpa %s370, 1
    %372 = vsyncpa [#allocation9], 1
    %s373 = scalar_lea.sflag [#allocation9], 1
    %374 = vsyncpa %s373, 1

</llo_original>
